<compile_context>
chip_gen: v5e
topology: v5e:2x2
jax: 0.10.0
libtpu: 0.0.40
codegen_flags: <defaults>
</compile_context>

<pallas_src>
import jax
import jax.numpy as jnp
from jax.experimental import pallas as pl
from jax.experimental.pallas import tpu as pltpu

_SUBLANES = 8
_MAX_TILE_B = 1024            # plenty to amortize the ~0.35 us/step grid overhead
_VMEM_STREAM_BUDGET = 8 << 20  # bytes for the double-buffered x/out streams (v7x-safe)


def _round_up(x, m):
    return (x + m - 1) // m * m


def _cdiv(a, b):
    return -(-a // b)


def _pick_tile_b(B, D):
    """Pick TILE_B: multiple of 8, minimal batch-pad waste, VMEM-safe, and
    (for v7x megacore) at least 2 grid steps when there is enough work."""
    # x (f32) + out (f32), each double-buffered.
    bytes_per_row = 2 * (D * 4) * 2
    vmem_rows = max(_SUBLANES, (_VMEM_STREAM_BUDGET // max(bytes_per_row, 1)) // _SUBLANES * _SUBLANES)
    max_tile = min(_MAX_TILE_B, vmem_rows)

    min_tiles = 2 if B >= 2 * _SUBLANES else 1
    num_tiles = max(_cdiv(B, max_tile), min_tiles)
    tile_b = min(max_tile, _round_up(_cdiv(B, num_tiles), _SUBLANES))
    return tile_b


def _autoencoder_kernel(x_ref,
                        w1_ref, b1_ref, w2_ref, b2_ref, w3_ref, b3_ref,
                        w4_ref, b4_ref, w5_ref, b5_ref, w6_ref, b6_ref,
                        o_ref):
    """One (TILE_B, D) batch tile: 6 dependent matmuls, all on-chip."""

    def dense(h_bf16, w_ref, b_ref, relu):
        y = jnp.dot(h_bf16, w_ref[...], preferred_element_type=jnp.float32)
        y = y + b_ref[...]                      # bias / ReLU in f32 on the VPU
        if relu:
            y = jnp.maximum(y, 0.0)
        return y

    # In-kernel cast to bf16 (VPU filler under DMA slack; no wrapper pass).
    h = x_ref[...].astype(jnp.bfloat16)
    h = dense(h, w1_ref, b1_ref, True).astype(jnp.bfloat16)     # D   -> 64
    h = dense(h, w2_ref, b2_ref, True).astype(jnp.bfloat16)     # 64  -> 32
    h = dense(h, w3_ref, b3_ref, False).astype(jnp.bfloat16)    # 32  -> L (latent, no ReLU)
    h = dense(h, w4_ref, b4_ref, True).astype(jnp.bfloat16)     # L   -> 32
    h = dense(h, w5_ref, b5_ref, True).astype(jnp.bfloat16)     # 32  -> 64
    o_ref[...] = dense(h, w6_ref, b6_ref, False).astype(o_ref.dtype)  # 64 -> D


@jax.jit
def autoencoder_forward(x, params):
    """x: [B, D] float32. params: dict of f32 weights [in,out] / biases [1,out]."""
    B, D = x.shape
    L = params["w3"].shape[1]

    TILE_B = _pick_tile_b(B, D)
    grid = (_cdiv(B, TILE_B),)   # partial final block handled by Pallas masking

    w1 = params["w1"].astype(jnp.bfloat16)
    b1 = params["b1"].astype(jnp.float32)
    w2 = params["w2"].astype(jnp.bfloat16)
    b2 = params["b2"].astype(jnp.float32)
    w3 = params["w3"].astype(jnp.bfloat16)
    b3 = params["b3"].astype(jnp.float32)
    w4 = params["w4"].astype(jnp.bfloat16)
    b4 = params["b4"].astype(jnp.float32)
    w5 = params["w5"].astype(jnp.bfloat16)
    b5 = params["b5"].astype(jnp.float32)
    w6 = params["w6"].astype(jnp.bfloat16)
    b6 = params["b6"].astype(jnp.float32)

    args = (x, w1, b1, w2, b2, w3, b3, w4, b4, w5, b5, w6, b6)

    x_spec = pl.BlockSpec((TILE_B, D), lambda i: (i, 0))
    out_spec = pl.BlockSpec((TILE_B, D), lambda i: (i, 0))
    # Weights/biases: full-array blocks, constant index_map -> VMEM-resident.
    param_specs = [pl.BlockSpec(a.shape, lambda i: (0, 0)) for a in args[1:]]

    flops = 2 * B * (D * 64 + 64 * 32 + 32 * L + L * 32 + 32 * 64 + 64 * D)
    bytes_accessed = (x.size * x.dtype.itemsize                    # input read
                      + B * D * 4                                  # f32 output write
                      + sum(a.size * a.dtype.itemsize for a in args[1:]))

    out = pl.pallas_call(
        _autoencoder_kernel,
        out_shape=jax.ShapeDtypeStruct((B, D), jnp.float32),
        grid=grid,
        in_specs=[x_spec] + param_specs,
        out_specs=out_spec,
        compiler_params=pltpu.CompilerParams(
            dimension_semantics=("parallel",)),
        cost_estimate=pl.CostEstimate(
            flops=flops, transcendentals=0, bytes_accessed=bytes_accessed),
    )(*args)

    return out


def init_params(key, input_dim, latent_dim=16, dtype=jnp.float32):
    """Deterministic synthetic parameters. Weights stored as [in, out]."""
    dims = [(input_dim, 64), (64, 32), (32, latent_dim),
            (latent_dim, 32), (32, 64), (64, input_dim)]
    params = {}
    keys = jax.random.split(key, 2 * len(dims))
    for i, (din, dout) in enumerate(dims):
        bound = 1.0 / (din ** 0.5)  # mimic nn.Linear's uniform scale
        params[f"w{i+1}"] = jax.random.uniform(
            keys[2 * i], (din, dout), dtype, minval=-bound, maxval=bound)
        params[f"b{i+1}"] = jax.random.uniform(
            keys[2 * i + 1], (1, dout), dtype, minval=-bound, maxval=bound)
    return params


def _reference_forward_f32(x, params):
    h = x
    h = jnp.maximum(h @ params["w1"] + params["b1"], 0.0)
    h = jnp.maximum(h @ params["w2"] + params["b2"], 0.0)
    z = h @ params["w3"] + params["b3"]
    h = jnp.maximum(z @ params["w4"] + params["b4"], 0.0)
    h = jnp.maximum(h @ params["w5"] + params["b5"], 0.0)
    return h @ params["w6"] + params["b6"]


def _reference_forward_bf16(x, params):
    """Mirror the kernel's numerics: bf16 MXU inputs, f32 accumulate/bias/ReLU."""
    def dense(h, w, b, relu):
        y = jnp.dot(h.astype(jnp.bfloat16), w.astype(jnp.bfloat16),
                    preferred_element_type=jnp.float32) + b
        return jnp.maximum(y, 0.0) if relu else y

    h = x
    h = dense(h, params["w1"], params["b1"], True).astype(jnp.bfloat16)
    h = dense(h, params["w2"], params["b2"], True).astype(jnp.bfloat16)
    h = dense(h, params["w3"], params["b3"], False).astype(jnp.bfloat16)
    h = dense(h, params["w4"], params["b4"], True).astype(jnp.bfloat16)
    h = dense(h, params["w5"], params["b5"], True).astype(jnp.bfloat16)
    return dense(h, params["w6"], params["b6"], False)


if __name__ == "__main__":
    D, L = 64, 16  # input_dim, latent_dim

    key = jax.random.PRNGKey(0)
    kx, kp, kx2 = jax.random.split(key, 3)
    params = init_params(kp, input_dim=D, latent_dim=L)

    # Case 1: small aligned batch (single grid step).
    x = jax.random.normal(kx, (8, D), jnp.float32)
    out = jax.block_until_ready(autoencoder_forward(x, params))
    assert out.shape == (8, D), out.shape
    assert jnp.allclose(out, _reference_forward_bf16(x, params),
                        atol=1e-3, rtol=1e-3), "mismatch vs bf16 reference"
    assert jnp.allclose(out, _reference_forward_f32(x, params),
                        atol=5e-2, rtol=5e-2), "mismatch vs f32 reference"

    # Case 2: batch not a multiple of the tile (exercises the masked partial
    # last block and the two-grid-step path used for v7x megacore sharding).
    x2 = jax.random.normal(kx2, (20, D), jnp.float32)
    out2 = jax.block_until_ready(autoencoder_forward(x2, params))
    assert out2.shape == (20, D), out2.shape
    assert jnp.allclose(out2, _reference_forward_bf16(x2, params),
                        atol=1e-3, rtol=1e-3), "mismatch vs bf16 reference (partial tile)"
    assert jnp.allclose(out2, _reference_forward_f32(x2, params),
                        atol=5e-2, rtol=5e-2), "mismatch vs f32 reference (partial tile)"

    print("KERNEL_OK")
</pallas_src>

<mosaic_0001>
module attributes {stable_mosaic.version = 11 : i64} {
  func.func @_autoencoder_kernel(%arg0: i32, %arg1: memref<8x64xf32, #tpu.memory_space<vmem>>, %arg2: memref<64x64xbf16, #tpu.memory_space<vmem>>, %arg3: memref<1x64xf32, #tpu.memory_space<vmem>>, %arg4: memref<64x32xbf16, #tpu.memory_space<vmem>>, %arg5: memref<1x32xf32, #tpu.memory_space<vmem>>, %arg6: memref<32x16xbf16, #tpu.memory_space<vmem>>, %arg7: memref<1x16xf32, #tpu.memory_space<vmem>>, %arg8: memref<16x32xbf16, #tpu.memory_space<vmem>>, %arg9: memref<1x32xf32, #tpu.memory_space<vmem>>, %arg10: memref<32x64xbf16, #tpu.memory_space<vmem>>, %arg11: memref<1x64xf32, #tpu.memory_space<vmem>>, %arg12: memref<64x64xbf16, #tpu.memory_space<vmem>>, %arg13: memref<1x64xf32, #tpu.memory_space<vmem>>, %arg14: memref<8x64xf32, #tpu.memory_space<vmem>>) attributes {dimension_semantics = [#tpu.dimension_semantics<parallel>], iteration_bounds = array<i64: 1>, scalar_prefetch = 0 : i64, scratch_operands = 0 : i64, tpu.core_type = #tpu.core_type<tc>, window_params = [{transform_indices = @transform_0, window_bounds = array<i64: 8, 64>}, {pipeline_mode = #tpu.pipeline_mode<synchronous>, transform_indices = @transform_1, window_bounds = array<i64: 64, 64>}, {pipeline_mode = #tpu.pipeline_mode<synchronous>, transform_indices = @transform_2, window_bounds = array<i64: 1, 64>}, {pipeline_mode = #tpu.pipeline_mode<synchronous>, transform_indices = @transform_3, window_bounds = array<i64: 64, 32>}, {pipeline_mode = #tpu.pipeline_mode<synchronous>, transform_indices = @transform_4, window_bounds = array<i64: 1, 32>}, {pipeline_mode = #tpu.pipeline_mode<synchronous>, transform_indices = @transform_5, window_bounds = array<i64: 32, 16>}, {pipeline_mode = #tpu.pipeline_mode<synchronous>, transform_indices = @transform_6, window_bounds = array<i64: 1, 16>}, {pipeline_mode = #tpu.pipeline_mode<synchronous>, transform_indices = @transform_7, window_bounds = array<i64: 16, 32>}, {pipeline_mode = #tpu.pipeline_mode<synchronous>, transform_indices = @transform_8, window_bounds = array<i64: 1, 32>}, {pipeline_mode = #tpu.pipeline_mode<synchronous>, transform_indices = @transform_9, window_bounds = array<i64: 32, 64>}, {pipeline_mode = #tpu.pipeline_mode<synchronous>, transform_indices = @transform_10, window_bounds = array<i64: 1, 64>}, {pipeline_mode = #tpu.pipeline_mode<synchronous>, transform_indices = @transform_11, window_bounds = array<i64: 64, 64>}, {pipeline_mode = #tpu.pipeline_mode<synchronous>, transform_indices = @transform_12, window_bounds = array<i64: 1, 64>}, {transform_indices = @transform_13, window_bounds = array<i64: 8, 64>}]} {
    %c0 = arith.constant 0 : index
    %c0_0 = arith.constant 0 : index
    %0 = vector.load %arg1[%c0, %c0_0] : memref<8x64xf32, #tpu.memory_space<vmem>>, vector<8x64xf32>
    %1 = arith.truncf %0 : vector<8x64xf32> to vector<8x64xbf16>
    %c0_1 = arith.constant 0 : index
    %c0_2 = arith.constant 0 : index
    %2 = vector.load %arg2[%c0_1, %c0_2] : memref<64x64xbf16, #tpu.memory_space<vmem>>, vector<64x64xbf16>
    %cst = arith.constant dense<0.000000e+00> : vector<8x64xf32>
    %3 = tpu.matmul %1, %2, %cst {dimension_numbers = #tpu.dot_dimension_numbers<[1], [0], [0], [1], [0, 0, 1, 1], [], []>} : vector<8x64xbf16>, vector<64x64xbf16>, vector<8x64xf32> -> vector<8x64xf32>
    %c0_3 = arith.constant 0 : index
    %c0_4 = arith.constant 0 : index
    %4 = vector.load %arg3[%c0_3, %c0_4] : memref<1x64xf32, #tpu.memory_space<vmem>>, vector<1x64xf32>
    %5 = vector.broadcast %4 : vector<1x64xf32> to vector<8x64xf32>
    %6 = arith.addf %3, %5 : vector<8x64xf32>
    %cst_5 = arith.constant 0.000000e+00 : f32
    %7 = vector.broadcast %cst_5 : f32 to vector<8x64xf32>
    %8 = arith.maximumf %6, %7 : vector<8x64xf32>
    %9 = arith.truncf %8 : vector<8x64xf32> to vector<8x64xbf16>
    %c0_6 = arith.constant 0 : index
    %c0_7 = arith.constant 0 : index
    %10 = vector.load %arg4[%c0_6, %c0_7] : memref<64x32xbf16, #tpu.memory_space<vmem>>, vector<64x32xbf16>
    %cst_8 = arith.constant dense<0.000000e+00> : vector<8x32xf32>
    %11 = tpu.matmul %9, %10, %cst_8 {dimension_numbers = #tpu.dot_dimension_numbers<[1], [0], [0], [1], [0, 0, 1, 1], [], []>} : vector<8x64xbf16>, vector<64x32xbf16>, vector<8x32xf32> -> vector<8x32xf32>
    %c0_9 = arith.constant 0 : index
    %c0_10 = arith.constant 0 : index
    %12 = vector.load %arg5[%c0_9, %c0_10] : memref<1x32xf32, #tpu.memory_space<vmem>>, vector<1x32xf32>
    %13 = vector.broadcast %12 : vector<1x32xf32> to vector<8x32xf32>
    %14 = arith.addf %11, %13 : vector<8x32xf32>
    %cst_11 = arith.constant 0.000000e+00 : f32
    %15 = vector.broadcast %cst_11 : f32 to vector<8x32xf32>
    %16 = arith.maximumf %14, %15 : vector<8x32xf32>
    %17 = arith.truncf %16 : vector<8x32xf32> to vector<8x32xbf16>
    %c0_12 = arith.constant 0 : index
    %c0_13 = arith.constant 0 : index
    %18 = vector.load %arg6[%c0_12, %c0_13] : memref<32x16xbf16, #tpu.memory_space<vmem>>, vector<32x16xbf16>
    %cst_14 = arith.constant dense<0.000000e+00> : vector<8x16xf32>
    %19 = tpu.matmul %17, %18, %cst_14 {dimension_numbers = #tpu.dot_dimension_numbers<[1], [0], [0], [1], [0, 0, 1, 1], [], []>} : vector<8x32xbf16>, vector<32x16xbf16>, vector<8x16xf32> -> vector<8x16xf32>
    %c0_15 = arith.constant 0 : index
    %c0_16 = arith.constant 0 : index
    %20 = vector.load %arg7[%c0_15, %c0_16] : memref<1x16xf32, #tpu.memory_space<vmem>>, vector<1x16xf32>
    %21 = vector.broadcast %20 : vector<1x16xf32> to vector<8x16xf32>
    %22 = arith.addf %19, %21 : vector<8x16xf32>
    %23 = arith.truncf %22 : vector<8x16xf32> to vector<8x16xbf16>
    %c0_17 = arith.constant 0 : index
    %c0_18 = arith.constant 0 : index
    %24 = vector.load %arg8[%c0_17, %c0_18] : memref<16x32xbf16, #tpu.memory_space<vmem>>, vector<16x32xbf16>
    %cst_19 = arith.constant dense<0.000000e+00> : vector<8x32xf32>
    %25 = tpu.matmul %23, %24, %cst_19 {dimension_numbers = #tpu.dot_dimension_numbers<[1], [0], [0], [1], [0, 0, 1, 1], [], []>} : vector<8x16xbf16>, vector<16x32xbf16>, vector<8x32xf32> -> vector<8x32xf32>
    %c0_20 = arith.constant 0 : index
    %c0_21 = arith.constant 0 : index
    %26 = vector.load %arg9[%c0_20, %c0_21] : memref<1x32xf32, #tpu.memory_space<vmem>>, vector<1x32xf32>
    %27 = vector.broadcast %26 : vector<1x32xf32> to vector<8x32xf32>
    %28 = arith.addf %25, %27 : vector<8x32xf32>
    %cst_22 = arith.constant 0.000000e+00 : f32
    %29 = vector.broadcast %cst_22 : f32 to vector<8x32xf32>
    %30 = arith.maximumf %28, %29 : vector<8x32xf32>
    %31 = arith.truncf %30 : vector<8x32xf32> to vector<8x32xbf16>
    %c0_23 = arith.constant 0 : index
    %c0_24 = arith.constant 0 : index
    %32 = vector.load %arg10[%c0_23, %c0_24] : memref<32x64xbf16, #tpu.memory_space<vmem>>, vector<32x64xbf16>
    %cst_25 = arith.constant dense<0.000000e+00> : vector<8x64xf32>
    %33 = tpu.matmul %31, %32, %cst_25 {dimension_numbers = #tpu.dot_dimension_numbers<[1], [0], [0], [1], [0, 0, 1, 1], [], []>} : vector<8x32xbf16>, vector<32x64xbf16>, vector<8x64xf32> -> vector<8x64xf32>
    %c0_26 = arith.constant 0 : index
    %c0_27 = arith.constant 0 : index
    %34 = vector.load %arg11[%c0_26, %c0_27] : memref<1x64xf32, #tpu.memory_space<vmem>>, vector<1x64xf32>
    %35 = vector.broadcast %34 : vector<1x64xf32> to vector<8x64xf32>
    %36 = arith.addf %33, %35 : vector<8x64xf32>
    %cst_28 = arith.constant 0.000000e+00 : f32
    %37 = vector.broadcast %cst_28 : f32 to vector<8x64xf32>
    %38 = arith.maximumf %36, %37 : vector<8x64xf32>
    %39 = arith.truncf %38 : vector<8x64xf32> to vector<8x64xbf16>
    %c0_29 = arith.constant 0 : index
    %c0_30 = arith.constant 0 : index
    %40 = vector.load %arg12[%c0_29, %c0_30] : memref<64x64xbf16, #tpu.memory_space<vmem>>, vector<64x64xbf16>
    %cst_31 = arith.constant dense<0.000000e+00> : vector<8x64xf32>
    %41 = tpu.matmul %39, %40, %cst_31 {dimension_numbers = #tpu.dot_dimension_numbers<[1], [0], [0], [1], [0, 0, 1, 1], [], []>} : vector<8x64xbf16>, vector<64x64xbf16>, vector<8x64xf32> -> vector<8x64xf32>
    %c0_32 = arith.constant 0 : index
    %c0_33 = arith.constant 0 : index
    %42 = vector.load %arg13[%c0_32, %c0_33] : memref<1x64xf32, #tpu.memory_space<vmem>>, vector<1x64xf32>
    %43 = vector.broadcast %42 : vector<1x64xf32> to vector<8x64xf32>
    %44 = arith.addf %41, %43 : vector<8x64xf32>
    %c0_34 = arith.constant 0 : index
    %c0_35 = arith.constant 0 : index
    %45 = vector.load %arg14[%c0_34, %c0_35] : memref<8x64xf32, #tpu.memory_space<vmem>>, vector<8x64xf32>
    tpu.vector_store %arg14[%c0_34, %c0_35], %44 {strides = array<i32>} : memref<8x64xf32, #tpu.memory_space<vmem>>, vector<8x64xf32>,
    return
  }
  func.func @transform_0(%arg0: i32) -> (i32, i32) {
    %c0_i32 = arith.constant 0 : i32
    %c0_i32_0 = arith.constant 0 : i32
    return %arg0, %c0_i32 : i32, i32
  }
  func.func @transform_1(%arg0: i32) -> (i32, i32) {
    %c0_i32 = arith.constant 0 : i32
    %c0_i32_0 = arith.constant 0 : i32
    %c0_i32_1 = arith.constant 0 : i32
    return %c0_i32, %c0_i32_0 : i32, i32
  }
  func.func @transform_2(%arg0: i32) -> (i32, i32) {
    %c0_i32 = arith.constant 0 : i32
    %c0_i32_0 = arith.constant 0 : i32
    %c0_i32_1 = arith.constant 0 : i32
    return %c0_i32, %c0_i32_0 : i32, i32
  }
  func.func @transform_3(%arg0: i32) -> (i32, i32) {
    %c0_i32 = arith.constant 0 : i32
    %c0_i32_0 = arith.constant 0 : i32
    %c0_i32_1 = arith.constant 0 : i32
    return %c0_i32, %c0_i32_0 : i32, i32
  }
  func.func @transform_4(%arg0: i32) -> (i32, i32) {
    %c0_i32 = arith.constant 0 : i32
    %c0_i32_0 = arith.constant 0 : i32
    %c0_i32_1 = arith.constant 0 : i32
    return %c0_i32, %c0_i32_0 : i32, i32
  }
  func.func @transform_5(%arg0: i32) -> (i32, i32) {
    %c0_i32 = arith.constant 0 : i32
    %c0_i32_0 = arith.constant 0 : i32
    %c0_i32_1 = arith.constant 0 : i32
    return %c0_i32, %c0_i32_0 : i32, i32
  }
  func.func @transform_6(%arg0: i32) -> (i32, i32) {
    %c0_i32 = arith.constant 0 : i32
    %c0_i32_0 = arith.constant 0 : i32
    %c0_i32_1 = arith.constant 0 : i32
    return %c0_i32, %c0_i32_0 : i32, i32
  }
  func.func @transform_7(%arg0: i32) -> (i32, i32) {
    %c0_i32 = arith.constant 0 : i32
    %c0_i32_0 = arith.constant 0 : i32
    %c0_i32_1 = arith.constant 0 : i32
    return %c0_i32, %c0_i32_0 : i32, i32
  }
  func.func @transform_8(%arg0: i32) -> (i32, i32) {
    %c0_i32 = arith.constant 0 : i32
    %c0_i32_0 = arith.constant 0 : i32
    %c0_i32_1 = arith.constant 0 : i32
    return %c0_i32, %c0_i32_0 : i32, i32
  }
  func.func @transform_9(%arg0: i32) -> (i32, i32) {
    %c0_i32 = arith.constant 0 : i32
    %c0_i32_0 = arith.constant 0 : i32
    %c0_i32_1 = arith.constant 0 : i32
    return %c0_i32, %c0_i32_0 : i32, i32
  }
  func.func @transform_10(%arg0: i32) -> (i32, i32) {
    %c0_i32 = arith.constant 0 : i32
    %c0_i32_0 = arith.constant 0 : i32
    %c0_i32_1 = arith.constant 0 : i32
    return %c0_i32, %c0_i32_0 : i32, i32
  }
  func.func @transform_11(%arg0: i32) -> (i32, i32) {
    %c0_i32 = arith.constant 0 : i32
    %c0_i32_0 = arith.constant 0 : i32
    %c0_i32_1 = arith.constant 0 : i32
    return %c0_i32, %c0_i32_0 : i32, i32
  }
  func.func @transform_12(%arg0: i32) -> (i32, i32) {
    %c0_i32 = arith.constant 0 : i32
    %c0_i32_0 = arith.constant 0 : i32
    %c0_i32_1 = arith.constant 0 : i32
    return %c0_i32, %c0_i32_0 : i32, i32
  }
  func.func @transform_13(%arg0: i32) -> (i32, i32) {
    %c0_i32 = arith.constant 0 : i32
    %c0_i32_0 = arith.constant 0 : i32
    return %arg0, %c0_i32 : i32, i32
  }
}

</mosaic_0001>

<llo_original>
// kernel: autoencoder_forward.1
$region0: #{autoencoder_forward.1}
  #allocation0 [shape = 'u32[]', space=smem, size = 0x4, offset = 0x4, fixed_abs, tag = 'smem constant byte address 0x4 - core index']
  #allocation1 [shape = 'u32[72,128]{1,0:T(1,128)}', space=vmem, size = 0x9000, scoped, tag = 'internal scratch']
  %s0 = inlined_call_operand.vmem [shape: f32[8,64], index: 0, kind: input, shape index: {}]
  %s1 = inlined_call_operand.vmem [shape: bf16[64,64], index: 1, kind: input, shape index: {}]
  %s2 = inlined_call_operand.vmem [shape: f32[1,64], index: 2, kind: input, shape index: {}]
  %s3 = inlined_call_operand.vmem [shape: bf16[64,32], index: 3, kind: input, shape index: {}]
  %s4 = inlined_call_operand.vmem [shape: f32[1,32], index: 4, kind: input, shape index: {}]
  %s5 = inlined_call_operand.vmem [shape: bf16[32,16], index: 5, kind: input, shape index: {}]
  %s6 = inlined_call_operand.vmem [shape: f32[1,16], index: 6, kind: input, shape index: {}]
  %s7 = inlined_call_operand.vmem [shape: bf16[16,32], index: 7, kind: input, shape index: {}]
  %s8 = inlined_call_operand.vmem [shape: f32[1,32], index: 8, kind: input, shape index: {}]
  %s9 = inlined_call_operand.vmem [shape: bf16[32,64], index: 9, kind: input, shape index: {}]
  %s10 = inlined_call_operand.vmem [shape: f32[1,64], index: 10, kind: input, shape index: {}]
  %s11 = inlined_call_operand.vmem [shape: bf16[64,64], index: 11, kind: input, shape index: {}]
  %s12 = inlined_call_operand.vmem [shape: f32[1,64], index: 12, kind: input, shape index: {}]
  %s13 = inlined_call_operand.hbm [shape: f32[8,64], index: 13, kind: output, shape index: {}]
  %s14 = sld [smem:[#allocation0]]
  $region62: #{autoencoder_forward.1} parent=0
    _
  %s16 = ssub.s32 1, %s14
  %s17 = scalar_select 0, %s16, %s14
  $region1: #{autoencoder_forward.1} parent=0
    #allocation2 [shape = 'u8[4096]{0}', space=vmem, size = 0x1000, scoped, tag = 'output window, operand 0, single buffered']
    #allocation3 [shape = 's32[1]{0}', space=sflag, size = 0x4, scoped, tag = 'scoped memory for autoencoder_forward.1']
    %18 = vsyncpa [#allocation3], 0
    // Predicated region
    $region2: #{autoencoder_forward.1} parent=1 // pred_check
      _
    $region3: #{autoencoder_forward.1} parent=1 // pred_check_branch
      %20 = sbr.rel (0) target = $region5
    $region4: #{autoencoder_forward.1} parent=1 // pred_region
      _
    $region5: #{autoencoder_forward.1} parent=1 // pred_fallthru
      _
    // Predicated region
    $region6: #{autoencoder_forward.1} parent=1 // pred_check
      _
    $region7: #{autoencoder_forward.1} parent=1 // pred_check_branch
      %22 = sbr.rel (0) target = $region9
    $region8: #{autoencoder_forward.1} parent=1 // pred_region
      _
    $region9: #{autoencoder_forward.1} parent=1 // pred_fallthru
      _
    // Predicated region
    $region10: #{autoencoder_forward.1} parent=1 // pred_check
      _
    $region11: #{autoencoder_forward.1} parent=1 // pred_check_branch
      %24 = sbr.rel (0) target = $region13
    $region12: #{autoencoder_forward.1} parent=1 // pred_region
      _
    $region13: #{autoencoder_forward.1} parent=1 // pred_fallthru
      _
    // Predicated region
    $region14: #{autoencoder_forward.1} parent=1 // pred_check
      _
    $region15: #{autoencoder_forward.1} parent=1 // pred_check_branch
      %26 = sbr.rel (0) target = $region17
    $region16: #{autoencoder_forward.1} parent=1 // pred_region
      _
    $region17: #{autoencoder_forward.1} parent=1 // pred_fallthru
      _
    // Predicated region
    $region18: #{autoencoder_forward.1} parent=1 // pred_check
      _
    $region19: #{autoencoder_forward.1} parent=1 // pred_check_branch
      %28 = sbr.rel (0) target = $region21
    $region20: #{autoencoder_forward.1} parent=1 // pred_region
      _
    $region21: #{autoencoder_forward.1} parent=1 // pred_fallthru
      _
    // Predicated region
    $region22: #{autoencoder_forward.1} parent=1 // pred_check
      _
    $region23: #{autoencoder_forward.1} parent=1 // pred_check_branch
      %30 = sbr.rel (0) target = $region25
    $region24: #{autoencoder_forward.1} parent=1 // pred_region
      _
    $region25: #{autoencoder_forward.1} parent=1 // pred_fallthru
      _
    // Predicated region
    $region26: #{autoencoder_forward.1} parent=1 // pred_check
      _
    $region27: #{autoencoder_forward.1} parent=1 // pred_check_branch
      %32 = sbr.rel (0) target = $region29
    $region28: #{autoencoder_forward.1} parent=1 // pred_region
      _
    $region29: #{autoencoder_forward.1} parent=1 // pred_fallthru
      _
    // Predicated region
    $region30: #{autoencoder_forward.1} parent=1 // pred_check
      _
    $region31: #{autoencoder_forward.1} parent=1 // pred_check_branch
      %34 = sbr.rel (0) target = $region33
    $region32: #{autoencoder_forward.1} parent=1 // pred_region
      _
    $region33: #{autoencoder_forward.1} parent=1 // pred_fallthru
      _
    // Predicated region
    $region34: #{autoencoder_forward.1} parent=1 // pred_check
      _
    $region35: #{autoencoder_forward.1} parent=1 // pred_check_branch
      %36 = sbr.rel (0) target = $region37
    $region36: #{autoencoder_forward.1} parent=1 // pred_region
      _
    $region37: #{autoencoder_forward.1} parent=1 // pred_fallthru
      _
    // Predicated region
    $region38: #{autoencoder_forward.1} parent=1 // pred_check
      _
    $region39: #{autoencoder_forward.1} parent=1 // pred_check_branch
      %38 = sbr.rel (0) target = $region41
    $region40: #{autoencoder_forward.1} parent=1 // pred_region
      _
    $region41: #{autoencoder_forward.1} parent=1 // pred_fallthru
      _
    // Predicated region
    $region42: #{autoencoder_forward.1} parent=1 // pred_check
      _
    $region43: #{autoencoder_forward.1} parent=1 // pred_check_branch
      %40 = sbr.rel (0) target = $region45
    $region44: #{autoencoder_forward.1} parent=1 // pred_region
      _
    $region45: #{autoencoder_forward.1} parent=1 // pred_fallthru
      _
    // Predicated region
    $region46: #{autoencoder_forward.1} parent=1 // pred_check
      _
    $region47: #{autoencoder_forward.1} parent=1 // pred_check_branch
      %42 = sbr.rel (0) target = $region49
    $region48: #{autoencoder_forward.1} parent=1 // pred_region
      _
    $region49: #{autoencoder_forward.1} parent=1 // pred_fallthru
      _
    // Predicated region
    $region50: #{autoencoder_forward.1} parent=1 // pred_check
      _
    $region51: #{autoencoder_forward.1} parent=1 // pred_check_branch
      %44 = sbr.rel (0) target = $region53
    $region52: #{autoencoder_forward.1} parent=1 // pred_region
      _
    $region53: #{autoencoder_forward.1} parent=1 // pred_fallthru
      _
    %v46 = vld [vmem:[%s0] sm:$0xff]
    %v47 = vpack.c.bf16 %v46, %v46
    %v48 = vld [vmem:[%s1] sm:$0xf]
    %v49 = vld [vmem:[%s1 + $0x4] sm:$0xf]
    %v50 = vld [vmem:[%s1 + $0x8] sm:$0xf]
    %v51 = vld [vmem:[%s1 + $0xc] sm:$0xf]
    %v52 = vld [vmem:[%s1 + $0x10] sm:$0xf]
    %v53 = vld [vmem:[%s1 + $0x14] sm:$0xf]
    %v54 = vld [vmem:[%s1 + $0x18] sm:$0xf]
    %v55 = vld [vmem:[%s1 + $0x1c] sm:$0xf]
    %v56 = vld [vmem:[%s2] sm:$0x1]
    %v58 = vperm.slane %v56, 0
    %v68 = vunpack.c.l.b16 %v48
    %v69 = vunpack.c.l.b16 %v49
    %v70 = vunpack.c.l.b16 %v50
    %v71 = vunpack.c.l.b16 %v51
    %v72 = vunpack.c.l.b16 %v52
    %v73 = vunpack.c.l.b16 %v53
    %v74 = vunpack.c.l.b16 %v54
    %v75 = vunpack.c.l.b16 %v55
    %v76 = vpack.c.b16 %v69, %v68
    %v77 = vpack.c.b16 %v71, %v70
    %v78 = vpack.c.b16 %v73, %v72
    %v79 = vpack.c.b16 %v75, %v74
    %vm84 = vcmask 523264
    %v86 = vsel %vm84, %v47, 0
    %88 = vmatpush.bf16.msra.mxu0 0
    %89 = vmatpush.bf16.msra.mxu0 0
    %90 = vmatpush.bf16.msra.mxu0 0
    %91 = vmatpush.bf16.msra.mxu0 0
    %92 = vmatpush.bf16.msra.mxu0 %v79
    %93 = vmatpush.bf16.msra.mxu0 %v78
    %94 = vmatpush.bf16.msra.mxu0 %v77
    %95 = vmatpush.bf16.msra.mxu0 %v76
    %96 = vmatmul.bf16.gmra.mxu0 %v86
    %v97 = vpop.f32.mrf.mxu0
    %v98 = vadd.f32 %v58, %v97
    %v99 = vpop.f32.mrf.mxu0
    %100 = vdwg.mxu0
    %v101 = vmax.f32 %v98, 0.0
    %v102 = vpack.c.bf16 %v101, %v101
    %v103 = vld [vmem:[%s3] sm:$0xf]
    %v104 = vld [vmem:[%s3 + $0x4] sm:$0xf]
    %v105 = vld [vmem:[%s3 + $0x8] sm:$0xf]
    %v106 = vld [vmem:[%s3 + $0xc] sm:$0xf]
    %v107 = vld [vmem:[%s3 + $0x10] sm:$0xf]
    %v108 = vld [vmem:[%s3 + $0x14] sm:$0xf]
    %v109 = vld [vmem:[%s3 + $0x18] sm:$0xf]
    %v110 = vld [vmem:[%s3 + $0x1c] sm:$0xf]
    %v111 = vld [vmem:[%s4] sm:$0x1]
    %v113 = vperm.slane %v111, 0
    %v123 = vunpack.c.l.b16 %v103
    %v124 = vunpack.c.l.b16 %v104
    %v125 = vunpack.c.l.b16 %v105
    %v126 = vunpack.c.l.b16 %v106
    %v127 = vunpack.c.l.b16 %v107
    %v128 = vunpack.c.l.b16 %v108
    %v129 = vunpack.c.l.b16 %v109
    %v130 = vunpack.c.l.b16 %v110
    %v131 = vpack.c.b16 %v124, %v123
    %v132 = vpack.c.b16 %v126, %v125
    %v133 = vpack.c.b16 %v128, %v127
    %v134 = vpack.c.b16 %v130, %v129
    %v140 = vsel %vm84, %v102, 0
    %142 = vmatpush.bf16.msra.mxu0 0
    %143 = vmatpush.bf16.msra.mxu0 0
    %144 = vmatpush.bf16.msra.mxu0 0
    %145 = vmatpush.bf16.msra.mxu0 0
    %146 = vmatpush.bf16.msra.mxu0 %v134
    %147 = vmatpush.bf16.msra.mxu0 %v133
    %148 = vmatpush.bf16.msra.mxu0 %v132
    %149 = vmatpush.bf16.msra.mxu0 %v131
    %150 = vmatmul.bf16.gmra.mxu0 %v140
    %v151 = vpop.f32.mrf.mxu0
    %v152 = vadd.f32 %v113, %v151
    %v153 = vpop.f32.mrf.mxu0
    %154 = vdwg.mxu0
    %v155 = vmax.f32 %v152, 0.0
    %v156 = vpack.c.bf16 %v155, %v155
    %v157 = vld [vmem:[%s5] sm:$0xf]
    %v158 = vld [vmem:[%s5 + $0x4] sm:$0xf]
    %v159 = vld [vmem:[%s5 + $0x8] sm:$0xf]
    %v160 = vld [vmem:[%s5 + $0xc] sm:$0xf]
    %v161 = vld [vmem:[%s6] sm:$0x1]
    %v163 = vperm.slane %v161, 0
    %v169 = vunpack.c.l.b16 %v157
    %v170 = vunpack.c.l.b16 %v158
    %v171 = vunpack.c.l.b16 %v159
    %v172 = vunpack.c.l.b16 %v160
    %v173 = vpack.c.b16 %v170, %v169
    %v174 = vpack.c.b16 %v172, %v171
    %vm177 = vcmask 261120
    %v179 = vsel %vm177, %v156, 0
    %181 = vmatpush.bf16.msra.mxu0 0
    %182 = vmatpush.bf16.msra.mxu0 0
    %183 = vmatpush.bf16.msra.mxu0 0
    %184 = vmatpush.bf16.msra.mxu0 0
    %185 = vmatpush.bf16.msra.mxu0 0
    %186 = vmatpush.bf16.msra.mxu0 0
    %187 = vmatpush.bf16.msra.mxu0 %v174
    %188 = vmatpush.bf16.msra.mxu0 %v173
    %189 = vmatmul.bf16.gmra.mxu0 %v179
    %v190 = vpop.f32.mrf.mxu0
    %v191 = vadd.f32 %v163, %v190
    %v192 = vpop.f32.mrf.mxu0
    %193 = vdwg.mxu0
    %v194 = vpack.c.bf16 %v191, %v191
    %v195 = vld [vmem:[%s7] sm:$0xf]
    %v196 = vld [vmem:[%s7 + $0x4] sm:$0xf]
    %v197 = vld [vmem:[%s8] sm:$0x1]
    %v199 = vperm.slane %v197, 0
    %v203 = vunpack.c.l.b16 %v195
    %v204 = vunpack.c.l.b16 %v196
    %v205 = vpack.c.b16 %v204, %v203
    %vm207 = vcmask 130048
    %v209 = vsel %vm207, %v194, 0
    %211 = vmatpush.bf16.msra.mxu0 0
    %212 = vmatpush.bf16.msra.mxu0 0
    %213 = vmatpush.bf16.msra.mxu0 0
    %214 = vmatpush.bf16.msra.mxu0 0
    %215 = vmatpush.bf16.msra.mxu0 0
    %216 = vmatpush.bf16.msra.mxu0 0
    %217 = vmatpush.bf16.msra.mxu0 0
    %218 = vmatpush.bf16.msra.mxu0 %v205
    %219 = vmatmul.bf16.gmra.mxu0 %v209
    %v220 = vpop.f32.mrf.mxu0
    %v221 = vadd.f32 %v199, %v220
    %v222 = vpop.f32.mrf.mxu0
    %223 = vdwg.mxu0
    %v224 = vmax.f32 %v221, 0.0
    %v225 = vpack.c.bf16 %v224, %v224
    %v226 = vld [vmem:[%s9] sm:$0xf]
    %v227 = vld [vmem:[%s9 + $0x4] sm:$0xf]
    %v228 = vld [vmem:[%s9 + $0x8] sm:$0xf]
    %v229 = vld [vmem:[%s9 + $0xc] sm:$0xf]
    %v230 = vld [vmem:[%s10] sm:$0x1]
    %v232 = vperm.slane %v230, 0
    %v238 = vunpack.c.l.b16 %v226
    %v239 = vunpack.c.l.b16 %v227
    %v240 = vunpack.c.l.b16 %v228
    %v241 = vunpack.c.l.b16 %v229
    %v242 = vpack.c.b16 %v239, %v238
    %v243 = vpack.c.b16 %v241, %v240
    %v247 = vsel %vm177, %v225, 0
    %249 = vmatpush.bf16.msra.mxu0 0
    %250 = vmatpush.bf16.msra.mxu0 0
    %251 = vmatpush.bf16.msra.mxu0 0
    %252 = vmatpush.bf16.msra.mxu0 0
    %253 = vmatpush.bf16.msra.mxu0 0
    %254 = vmatpush.bf16.msra.mxu0 0
    %255 = vmatpush.bf16.msra.mxu0 %v243
    %256 = vmatpush.bf16.msra.mxu0 %v242
    %257 = vmatmul.bf16.gmra.mxu0 %v247
    %v258 = vpop.f32.mrf.mxu0
    %v259 = vadd.f32 %v232, %v258
    %v260 = vpop.f32.mrf.mxu0
    %261 = vdwg.mxu0
    %v262 = vmax.f32 %v259, 0.0
    %v263 = vpack.c.bf16 %v262, %v262
    %v264 = vld [vmem:[%s11] sm:$0xf]
    %v265 = vld [vmem:[%s11 + $0x4] sm:$0xf]
    %v266 = vld [vmem:[%s11 + $0x8] sm:$0xf]
    %v267 = vld [vmem:[%s11 + $0xc] sm:$0xf]
    %v268 = vld [vmem:[%s11 + $0x10] sm:$0xf]
    %v269 = vld [vmem:[%s11 + $0x14] sm:$0xf]
    %v270 = vld [vmem:[%s11 + $0x18] sm:$0xf]
    %v271 = vld [vmem:[%s11 + $0x1c] sm:$0xf]
    %v272 = vld [vmem:[%s12] sm:$0x1]
    %v274 = vperm.slane %v272, 0
    %v284 = vunpack.c.l.b16 %v264
    %v285 = vunpack.c.l.b16 %v265
    %v286 = vunpack.c.l.b16 %v266
    %v287 = vunpack.c.l.b16 %v267
    %v288 = vunpack.c.l.b16 %v268
    %v289 = vunpack.c.l.b16 %v269
    %v290 = vunpack.c.l.b16 %v270
    %v291 = vunpack.c.l.b16 %v271
    %v292 = vpack.c.b16 %v285, %v284
    %v293 = vpack.c.b16 %v287, %v286
    %v294 = vpack.c.b16 %v289, %v288
    %v295 = vpack.c.b16 %v291, %v290
    %v301 = vsel %vm84, %v263, 0
    %303 = vmatpush.bf16.msra.mxu0 0
    %304 = vmatpush.bf16.msra.mxu0 0
    %305 = vmatpush.bf16.msra.mxu0 0
    %306 = vmatpush.bf16.msra.mxu0 0
    %307 = vmatpush.bf16.msra.mxu0 %v295
    %308 = vmatpush.bf16.msra.mxu0 %v294
    %309 = vmatpush.bf16.msra.mxu0 %v293
    %310 = vmatpush.bf16.msra.mxu0 %v292
    %311 = vmatmul.bf16.gmra.mxu0 %v301
    %v312 = vpop.f32.mrf.mxu0
    %v313 = vadd.f32 %v274, %v312
    %v314 = vpop.f32.mrf.mxu0
    %315 = vdwg.mxu0
    %316 = vst.msk [vmem:[#allocation2] sm:$0xff] %vm84, %v313
    // Predicated region
    $region54: #{autoencoder_forward.1} parent=1 // pred_check
      _
    $region55: #{autoencoder_forward.1} parent=1 // pred_check_branch
      %318 = sbr.rel (0) target = $region57
    $region56: #{autoencoder_forward.1} parent=1 // pred_region
      %320 = vsyncadd [#allocation3], 0
      %s322 = sshll.u32 [#allocation2], 4
      %s323 = int_to_ptr.vmem [resolvable:$true] %s322
      %s324 = sshll.u32 %s13, 4
      %s325 = int_to_ptr.hbm [resolvable:$true] %s324
      %327 = dma.vmem_to_hbm [thread:$0]  %s323, 128, %s325, [#allocation3]
    $region57: #{autoencoder_forward.1} parent=1 // pred_fallthru
      _
    // Predicated region
    $region58: #{autoencoder_forward.1} parent=1 // pred_check
      _
    $region59: #{autoencoder_forward.1} parent=1 // pred_check_branch
      %329 = sbr.rel (0) target = $region61
    $region60: #{autoencoder_forward.1} parent=1 // pred_region
      %331 = dma.done [#allocation3], 128
    $region61: #{autoencoder_forward.1} parent=1 // pred_fallthru
      _
    %332 = vsyncpa [#allocation3], 1

</llo_original>
